<compile_context>
chip_gen: v7x
topology: tpu7x:2x2x1
jax: 0.10.0
libtpu: 0.0.40
codegen_flags: <defaults>
</compile_context>

<pallas_src>
import functools

import jax
import jax.numpy as jnp
from jax.experimental import pallas as pl
from jax.experimental.pallas import tpu as pltpu


def _conv_bias_kernel(x_ref, w_ref, b_ref, mask_ref, out_ref, slab_ref, *, img_w):
    # x_ref    : (1, Cin, H*W)   one batch element (channels = sublanes, pixels = lanes)
    # w_ref    : (Cout, 9*Cin)   3x3 taps flattened tap-major / cin-minor
    # b_ref    : (Cout, 1)       per-output-channel bias
    # mask_ref : (9, H*W)        per-tap zero-padding mask (1 inside, 0 at image border)
    # out_ref  : (1, Cout, H*W)
    # slab_ref : VMEM scratch (9*Cin, H*W) im2col activation slab
    _, cin, hw = x_ref.shape

    x2d = x_ref[0]                                     # (Cin, H*W), loaded once

    for ky in range(3):
        for kx in range(3):
            t = ky * 3 + kx
            dy, dx = ky - 1, kx - 1
            s = dy * img_w + dx                        # flat source-pixel offset
            if s == 0:
                win = x2d                              # centre tap: no shift, no mask
            else:
                # rolled[p] == x2d[(p + s) % hw]   (lane rotation -> XLU slot)
                win = pltpu.roll(x2d, shift=(-s) % hw, axis=1)
                win = win * mask_ref[t:t + 1, :]       # zero wrapped border pixels (VPU)
            # sublane-aligned store (cin is a multiple of 8)
            slab_ref[t * cin:(t + 1) * cin, :] = win

    # single fused MXU matmul: (Cout, 9*Cin) @ (9*Cin, H*W) -> (Cout, H*W)
    y = jnp.dot(w_ref[...], slab_ref[...], preferred_element_type=jnp.float32)
    y = y + b_ref[...]                                 # bias, lane-broadcast
    # NOTE: ConvBiasRelu_D.forward() never applies ReLU, so neither do we.
    out_ref[0] = y                                     # dense lane-width = H*W store


def _l2_normalize(v, eps=1e-12):
    return v / (jnp.sqrt(jnp.sum(v * v)) + eps)


def spectral_normalize(weight, u0, n_power_iterations=1):
    """torch.nn.utils.spectral_norm applied to a conv weight (Cout, Cin, Kh, Kw)."""
    cout = weight.shape[0]
    w_mat = weight.reshape(cout, -1)
    u = _l2_normalize(u0)
    v = _l2_normalize(w_mat.T @ u)
    for _ in range(n_power_iterations):
        v = _l2_normalize(w_mat.T @ u)
        u = _l2_normalize(w_mat @ v)
    sigma = u @ (w_mat @ v)
    return weight / sigma


def _tap_masks(h, w):
    """(9, h*w) f32 validity masks for the 9 taps of a 3x3 'same' conv (zero padding)."""
    hh = jnp.arange(h).reshape(h, 1)
    ww = jnp.arange(w).reshape(1, w)
    masks = []
    for ky in range(3):
        for kx in range(3):
            dy, dx = ky - 1, kx - 1
            valid = ((hh + dy >= 0) & (hh + dy < h) &
                     (ww + dx >= 0) & (ww + dx < w))
            masks.append(valid.astype(jnp.float32).reshape(h * w))
    return jnp.stack(masks, axis=0)


def conv_bias_relu_d(x_nchw, weight, bias, u0, n_power_iterations=1):
    """ConvBiasRelu_D forward.  x: (N,Cin,H,W); weight: (Cout,Cin,3,3);
    bias: (1,Cout,1,1); u0: (Cout,) spectral-norm power-iteration vector."""
    n, cin, h, w = x_nchw.shape
    cout = weight.shape[0]
    assert weight.shape == (cout, cin, 3, 3)
    hw = h * w
    assert cin % 8 == 0 and hw % 128 == 0, "demo kernel assumes TPU-tileable sizes"

    w_sn = spectral_normalize(weight, u0, n_power_iterations)

    # kernel-friendly layouts (free reshapes / tiny weight-side transpose)
    x_flat = x_nchw.reshape(n, cin, hw).astype(jnp.float32)
    w_k = jnp.transpose(w_sn, (0, 2, 3, 1)).reshape(cout, 9 * cin).astype(jnp.float32)
    b_k = bias.reshape(cout, 1).astype(jnp.float32)
    masks = _tap_masks(h, w)

    kernel = functools.partial(_conv_bias_kernel, img_w=w)

    out_flat = pl.pallas_call(
        kernel,
        out_shape=jax.ShapeDtypeStruct((n, cout, hw), jnp.float32),
        grid_spec=pltpu.PrefetchScalarGridSpec(
            num_scalar_prefetch=0,
            grid=(n,),
            in_specs=[
                pl.BlockSpec((1, cin, hw), lambda i: (i, 0, 0)),
                pl.BlockSpec((cout, 9 * cin), lambda i: (0, 0)),
                pl.BlockSpec((cout, 1), lambda i: (0, 0)),
                pl.BlockSpec((9, hw), lambda i: (0, 0)),
            ],
            out_specs=pl.BlockSpec((1, cout, hw), lambda i: (i, 0, 0)),
            scratch_shapes=[pltpu.VMEM((9 * cin, hw), jnp.float32)],
        ),
        compiler_params=pltpu.CompilerParams(
            dimension_semantics=("parallel",)),
    )(x_flat, w_k, b_k, masks)

    return out_flat.reshape(n, cout, h, w)


def _reference(x, weight, bias, u0, n_power_iterations=1):
    w_sn = spectral_normalize(weight, u0, n_power_iterations)
    y = jax.lax.conv_general_dilated(
        x, w_sn, window_strides=(1, 1), padding="SAME",
        dimension_numbers=("NCHW", "OIHW", "NCHW"),
        precision=jax.lax.Precision.HIGHEST)
    return y + bias


if __name__ == "__main__":
    key = jax.random.PRNGKey(0)
    kx_, kw_, kb_, ku_ = jax.random.split(key, 4)

    N, C, H, W, K = 2, 16, 16, 16, 3
    Cout = 16
    x = jax.random.normal(kx_, (N, C, H, W), jnp.float32)

    # xavier_normal_: std = sqrt(2 / (fan_in + fan_out)), fan = ch * K * K
    std = (2.0 / (C * K * K + Cout * K * K)) ** 0.5
    weight = jax.random.normal(kw_, (Cout, C, K, K), jnp.float32) * std
    # bias is zero-initialised in the module; randomised slightly here to exercise the add
    bias = 0.1 * jax.random.normal(kb_, (1, Cout, 1, 1), jnp.float32)
    # spectral_norm's persistent power-iteration vector (random normal at init)
    u0 = jax.random.normal(ku_, (Cout,), jnp.float32)

    out = conv_bias_relu_d(x, weight, bias, u0)
    out = jax.block_until_ready(out)
    assert out.shape == (N, Cout, H, W), out.shape

    ref = _reference(x, weight, bias, u0)
    assert jnp.allclose(out, ref, atol=1e-3, rtol=1e-3), \
        float(jnp.max(jnp.abs(out - ref)))

    print("KERNEL_OK")
</pallas_src>

<mosaic_0001>
module attributes {stable_mosaic.version = 11 : i64} {
  func.func @_conv_bias_kernel(%arg0: i32, %arg1: memref<1x16x256xf32, #tpu.memory_space<vmem>>, %arg2: memref<16x144xf32, #tpu.memory_space<vmem>>, %arg3: memref<16x1xf32, #tpu.memory_space<vmem>>, %arg4: memref<9x256xf32, #tpu.memory_space<vmem>>, %arg5: memref<1x16x256xf32, #tpu.memory_space<vmem>>, %arg6: memref<144x256xf32, #tpu.memory_space<vmem>>) attributes {dimension_semantics = [#tpu.dimension_semantics<parallel>], iteration_bounds = array<i64: 2>, scalar_prefetch = 0 : i64, scratch_operands = 1 : i64, tpu.core_type = #tpu.core_type<tc>, window_params = [{transform_indices = @transform_0, window_bounds = array<i64: 1, 16, 256>}, {pipeline_mode = #tpu.pipeline_mode<synchronous>, transform_indices = @transform_1, window_bounds = array<i64: 16, 144>}, {pipeline_mode = #tpu.pipeline_mode<synchronous>, transform_indices = @transform_2, window_bounds = array<i64: 16, 1>}, {pipeline_mode = #tpu.pipeline_mode<synchronous>, transform_indices = @transform_3, window_bounds = array<i64: 9, 256>}, {transform_indices = @transform_4, window_bounds = array<i64: 1, 16, 256>}]} {
    %c0 = arith.constant 0 : index
    %c0_0 = arith.constant 0 : index
    %c0_1 = arith.constant 0 : index
    %0 = vector.load %arg1[%c0, %c0_0, %c0_1] : memref<1x16x256xf32, #tpu.memory_space<vmem>>, vector<1x16x256xf32>
    %1 = vector.shape_cast %0 : vector<1x16x256xf32> to vector<16x256xf32>
    %c17_i32 = arith.constant 17 : i32
    %2 = tpu.dynamic_rotate %1 by %c17_i32 dim 1 : vector<16x256xf32>, i32 -> vector<16x256xf32>
    %c0_2 = arith.constant 0 : index
    %c0_3 = arith.constant 0 : index
    %3 = vector.load %arg4[%c0_2, %c0_3] : memref<9x256xf32, #tpu.memory_space<vmem>>, vector<1x256xf32>
    %4 = vector.broadcast %3 : vector<1x256xf32> to vector<16x256xf32>
    %5 = arith.mulf %2, %4 : vector<16x256xf32>
    %c0_4 = arith.constant 0 : index
    %c0_5 = arith.constant 0 : index
    %6 = vector.load %arg6[%c0_4, %c0_5] : memref<144x256xf32, #tpu.memory_space<vmem>>, vector<16x256xf32>
    tpu.vector_store %arg6[%c0_4, %c0_5], %5 {strides = array<i32>} : memref<144x256xf32, #tpu.memory_space<vmem>>, vector<16x256xf32>,
    %c16_i32 = arith.constant 16 : i32
    %7 = tpu.dynamic_rotate %1 by %c16_i32 dim 1 : vector<16x256xf32>, i32 -> vector<16x256xf32>
    %c1 = arith.constant 1 : index
    %c0_6 = arith.constant 0 : index
    %8 = vector.load %arg4[%c1, %c0_6] : memref<9x256xf32, #tpu.memory_space<vmem>>, vector<1x256xf32>
    %9 = vector.broadcast %8 : vector<1x256xf32> to vector<16x256xf32>
    %10 = arith.mulf %7, %9 : vector<16x256xf32>
    %c16 = arith.constant 16 : index
    %c0_7 = arith.constant 0 : index
    %11 = vector.load %arg6[%c16, %c0_7] : memref<144x256xf32, #tpu.memory_space<vmem>>, vector<16x256xf32>
    tpu.vector_store %arg6[%c16, %c0_7], %10 {strides = array<i32>} : memref<144x256xf32, #tpu.memory_space<vmem>>, vector<16x256xf32>,
    %c15_i32 = arith.constant 15 : i32
    %12 = tpu.dynamic_rotate %1 by %c15_i32 dim 1 : vector<16x256xf32>, i32 -> vector<16x256xf32>
    %c2 = arith.constant 2 : index
    %c0_8 = arith.constant 0 : index
    %13 = vector.load %arg4[%c2, %c0_8] : memref<9x256xf32, #tpu.memory_space<vmem>>, vector<1x256xf32>
    %14 = vector.broadcast %13 : vector<1x256xf32> to vector<16x256xf32>
    %15 = arith.mulf %12, %14 : vector<16x256xf32>
    %c32 = arith.constant 32 : index
    %c0_9 = arith.constant 0 : index
    %16 = vector.load %arg6[%c32, %c0_9] : memref<144x256xf32, #tpu.memory_space<vmem>>, vector<16x256xf32>
    tpu.vector_store %arg6[%c32, %c0_9], %15 {strides = array<i32>} : memref<144x256xf32, #tpu.memory_space<vmem>>, vector<16x256xf32>,
    %c1_i32 = arith.constant 1 : i32
    %17 = tpu.dynamic_rotate %1 by %c1_i32 dim 1 : vector<16x256xf32>, i32 -> vector<16x256xf32>
    %c3 = arith.constant 3 : index
    %c0_10 = arith.constant 0 : index
    %18 = vector.load %arg4[%c3, %c0_10] : memref<9x256xf32, #tpu.memory_space<vmem>>, vector<1x256xf32>
    %19 = vector.broadcast %18 : vector<1x256xf32> to vector<16x256xf32>
    %20 = arith.mulf %17, %19 : vector<16x256xf32>
    %c48 = arith.constant 48 : index
    %c0_11 = arith.constant 0 : index
    %21 = vector.load %arg6[%c48, %c0_11] : memref<144x256xf32, #tpu.memory_space<vmem>>, vector<16x256xf32>
    tpu.vector_store %arg6[%c48, %c0_11], %20 {strides = array<i32>} : memref<144x256xf32, #tpu.memory_space<vmem>>, vector<16x256xf32>,
    %c64 = arith.constant 64 : index
    %c0_12 = arith.constant 0 : index
    %22 = vector.load %arg6[%c64, %c0_12] : memref<144x256xf32, #tpu.memory_space<vmem>>, vector<16x256xf32>
    tpu.vector_store %arg6[%c64, %c0_12], %1 {strides = array<i32>} : memref<144x256xf32, #tpu.memory_space<vmem>>, vector<16x256xf32>,
    %c255_i32 = arith.constant 255 : i32
    %23 = tpu.dynamic_rotate %1 by %c255_i32 dim 1 : vector<16x256xf32>, i32 -> vector<16x256xf32>
    %c5 = arith.constant 5 : index
    %c0_13 = arith.constant 0 : index
    %24 = vector.load %arg4[%c5, %c0_13] : memref<9x256xf32, #tpu.memory_space<vmem>>, vector<1x256xf32>
    %25 = vector.broadcast %24 : vector<1x256xf32> to vector<16x256xf32>
    %26 = arith.mulf %23, %25 : vector<16x256xf32>
    %c80 = arith.constant 80 : index
    %c0_14 = arith.constant 0 : index
    %27 = vector.load %arg6[%c80, %c0_14] : memref<144x256xf32, #tpu.memory_space<vmem>>, vector<16x256xf32>
    tpu.vector_store %arg6[%c80, %c0_14], %26 {strides = array<i32>} : memref<144x256xf32, #tpu.memory_space<vmem>>, vector<16x256xf32>,
    %c241_i32 = arith.constant 241 : i32
    %28 = tpu.dynamic_rotate %1 by %c241_i32 dim 1 : vector<16x256xf32>, i32 -> vector<16x256xf32>
    %c6 = arith.constant 6 : index
    %c0_15 = arith.constant 0 : index
    %29 = vector.load %arg4[%c6, %c0_15] : memref<9x256xf32, #tpu.memory_space<vmem>>, vector<1x256xf32>
    %30 = vector.broadcast %29 : vector<1x256xf32> to vector<16x256xf32>
    %31 = arith.mulf %28, %30 : vector<16x256xf32>
    %c96 = arith.constant 96 : index
    %c0_16 = arith.constant 0 : index
    %32 = vector.load %arg6[%c96, %c0_16] : memref<144x256xf32, #tpu.memory_space<vmem>>, vector<16x256xf32>
    tpu.vector_store %arg6[%c96, %c0_16], %31 {strides = array<i32>} : memref<144x256xf32, #tpu.memory_space<vmem>>, vector<16x256xf32>,
    %c240_i32 = arith.constant 240 : i32
    %33 = tpu.dynamic_rotate %1 by %c240_i32 dim 1 : vector<16x256xf32>, i32 -> vector<16x256xf32>
    %c7 = arith.constant 7 : index
    %c0_17 = arith.constant 0 : index
    %34 = vector.load %arg4[%c7, %c0_17] : memref<9x256xf32, #tpu.memory_space<vmem>>, vector<1x256xf32>
    %35 = vector.broadcast %34 : vector<1x256xf32> to vector<16x256xf32>
    %36 = arith.mulf %33, %35 : vector<16x256xf32>
    %c112 = arith.constant 112 : index
    %c0_18 = arith.constant 0 : index
    %37 = vector.load %arg6[%c112, %c0_18] : memref<144x256xf32, #tpu.memory_space<vmem>>, vector<16x256xf32>
    tpu.vector_store %arg6[%c112, %c0_18], %36 {strides = array<i32>} : memref<144x256xf32, #tpu.memory_space<vmem>>, vector<16x256xf32>,
    %c239_i32 = arith.constant 239 : i32
    %38 = tpu.dynamic_rotate %1 by %c239_i32 dim 1 : vector<16x256xf32>, i32 -> vector<16x256xf32>
    %c8 = arith.constant 8 : index
    %c0_19 = arith.constant 0 : index
    %39 = vector.load %arg4[%c8, %c0_19] : memref<9x256xf32, #tpu.memory_space<vmem>>, vector<1x256xf32>
    %40 = vector.broadcast %39 : vector<1x256xf32> to vector<16x256xf32>
    %41 = arith.mulf %38, %40 : vector<16x256xf32>
    %c128 = arith.constant 128 : index
    %c0_20 = arith.constant 0 : index
    %42 = vector.load %arg6[%c128, %c0_20] : memref<144x256xf32, #tpu.memory_space<vmem>>, vector<16x256xf32>
    tpu.vector_store %arg6[%c128, %c0_20], %41 {strides = array<i32>} : memref<144x256xf32, #tpu.memory_space<vmem>>, vector<16x256xf32>,
    %c0_21 = arith.constant 0 : index
    %c0_22 = arith.constant 0 : index
    %43 = vector.load %arg2[%c0_21, %c0_22] : memref<16x144xf32, #tpu.memory_space<vmem>>, vector<16x144xf32>
    %c0_23 = arith.constant 0 : index
    %c0_24 = arith.constant 0 : index
    %44 = vector.load %arg6[%c0_23, %c0_24] : memref<144x256xf32, #tpu.memory_space<vmem>>, vector<144x256xf32>
    %cst = arith.constant dense<0.000000e+00> : vector<16x256xf32>
    %45 = tpu.matmul %43, %44, %cst {dimension_numbers = #tpu.dot_dimension_numbers<[1], [0], [0], [1], [0, 0, 1, 1], [], []>} : vector<16x144xf32>, vector<144x256xf32>, vector<16x256xf32> -> vector<16x256xf32>
    %c0_25 = arith.constant 0 : index
    %c0_26 = arith.constant 0 : index
    %46 = vector.load %arg3[%c0_25, %c0_26] : memref<16x1xf32, #tpu.memory_space<vmem>>, vector<16x1xf32>
    %47 = vector.broadcast %46 : vector<16x1xf32> to vector<16x256xf32>
    %48 = arith.addf %45, %47 : vector<16x256xf32>
    %c0_27 = arith.constant 0 : index
    %c0_28 = arith.constant 0 : index
    %c0_29 = arith.constant 0 : index
    %49 = vector.load %arg5[%c0_27, %c0_28, %c0_29] : memref<1x16x256xf32, #tpu.memory_space<vmem>>, vector<1x16x256xf32>
    %50 = vector.shape_cast %49 : vector<1x16x256xf32> to vector<16x256xf32>
    %51 = vector.shape_cast %48 : vector<16x256xf32> to vector<1x16x256xf32>
    tpu.vector_store %arg5[%c0_27, %c0_28, %c0_29], %51 {strides = array<i32>} : memref<1x16x256xf32, #tpu.memory_space<vmem>>, vector<1x16x256xf32>,
    return
  }
  func.func @transform_0(%arg0: i32) -> (i32, i32, i32) {
    %c0_i32 = arith.constant 0 : i32
    %c0_i32_0 = arith.constant 0 : i32
    %c0_i32_1 = arith.constant 0 : i32
    return %arg0, %c0_i32, %c0_i32_0 : i32, i32, i32
  }
  func.func @transform_1(%arg0: i32) -> (i32, i32) {
    %c0_i32 = arith.constant 0 : i32
    %c0_i32_0 = arith.constant 0 : i32
    %c0_i32_1 = arith.constant 0 : i32
    return %c0_i32, %c0_i32_0 : i32, i32
  }
  func.func @transform_2(%arg0: i32) -> (i32, i32) {
    %c0_i32 = arith.constant 0 : i32
    %c0_i32_0 = arith.constant 0 : i32
    %c0_i32_1 = arith.constant 0 : i32
    return %c0_i32, %c0_i32_0 : i32, i32
  }
  func.func @transform_3(%arg0: i32) -> (i32, i32) {
    %c0_i32 = arith.constant 0 : i32
    %c0_i32_0 = arith.constant 0 : i32
    %c0_i32_1 = arith.constant 0 : i32
    return %c0_i32, %c0_i32_0 : i32, i32
  }
  func.func @transform_4(%arg0: i32) -> (i32, i32, i32) {
    %c0_i32 = arith.constant 0 : i32
    %c0_i32_0 = arith.constant 0 : i32
    %c0_i32_1 = arith.constant 0 : i32
    return %arg0, %c0_i32, %c0_i32_0 : i32, i32, i32
  }
}

</mosaic_0001>

<llo_original>
// kernel: tpu_custom_call.1
$region0: #{tpu_custom_call.1}
  #allocation0 [shape = 'u32[]', space=smem, size = 0x4, offset = 0x4, fixed_abs, tag = 'smem constant byte address 0x4 - core index']
  #allocation1 [shape = 'u32[144,128]{1,0:T(1,128)}', space=vmem, size = 0x12000, scoped, tag = 'internal scratch']
  #allocation2 [shape = 'f32[144,256]{1,0:T(8,128)}', space=vmem, size = 0x24000, scoped, tag = 'scratch operand']
  %s0 = inlined_call_operand.hbm [shape: f32[2,16,256], index: 0, kind: input, shape index: {}]
  %s1 = inlined_call_operand.hbm [shape: f32[16,144], index: 1, kind: input, shape index: {}]
  %s2 = inlined_call_operand.vmem [shape: f32[16,1], index: 2, kind: input, shape index: {}]
  %s3 = inlined_call_operand.hbm [shape: f32[9,256], index: 3, kind: input, shape index: {}]
  %s4 = inlined_call_operand.hbm [shape: f32[2,16,256], index: 4, kind: output, shape index: {}]
  %s5 = sld [smem:[#allocation0]]
  $region61: #{tpu_custom_call.1} parent=0
    _
  %s7 = ssub.s32 1, %s5
  %s8 = scalar_select 0, %s7, %s5
  $region1: #{tpu_custom_call.1} parent=0
    #allocation3 [shape = 'u8[32768]{0}', space=vmem, size = 0x8000, scoped, tag = 'input window, operand 0']
    #allocation4 [shape = 's32[2]{0}', space=sflag, size = 0x8, scoped, tag = 'scoped memory for tpu_custom_call.1']
    #allocation5 [shape = 's32[2]{0}', space=sflag, size = 0x8, scoped, tag = 'scoped memory for tpu_custom_call.1']
    #allocation6 [shape = 'u8[16384]{0}', space=vmem, size = 0x4000, scoped, tag = 'input window, operand 1, single buffered']
    #allocation7 [shape = 's32[1]{0}', space=sflag, size = 0x4, scoped, tag = 'scoped memory for tpu_custom_call.1']
    #allocation8 [shape = 'u8[16384]{0}', space=vmem, size = 0x4000, scoped, tag = 'input window, operand 3, single buffered']
    #allocation9 [shape = 'u8[32768]{0}', space=vmem, size = 0x8000, scoped, tag = 'output window, operand 0']
    %9 = vsyncpa [#allocation4], 0
    %s10 = scalar_lea.sflag [#allocation4], 1
    %11 = vsyncpa %s10, 0
    %12 = vsyncpa [#allocation7], 0
    %13 = vsyncpa [#allocation5], 0
    %s14 = scalar_lea.sflag [#allocation5], 1
    %15 = vsyncpa %s14, 0
    loop: start=0, step=1, limit=4
    $region2: #{tpu_custom_call.1} parent=1 // loop_pre_header
      _
    $region3: #{tpu_custom_call.1} parent=1 // loop_header
      %s17 = sphi 0, %s21
      %p18 = scmp.ge.s32.totalorder %s17, 4
      %s27 = sphi 0, %s29
      %s30 = sphi 0, %s27
      %s31 = sphi 0, %s30
      %s47 = sphi 0, %s31
      %s51 = sphi 0, %s51
      %s53 = sphi 0, %s51
      %s54 = sphi 0, %s53
      %s68 = sphi 0, %s54
      %s72 = sphi 0, %s72
      %s74 = sphi 0, %s72
      %s75 = sphi 0, %s74
      %s89 = sphi 0, %s75
      %s93 = sphi 0, %s93
      %s95 = sphi 0, %s93
      %s96 = sphi 0, %s95
      %s110 = sphi 0, %s96
      %s116 = sphi 0, %s118
      %s119 = sphi 0, %s116
      %s120 = sphi 0, %s119
      %s136 = sphi 0, %s120
    $region4: #{tpu_custom_call.1} parent=1 // loop_header_branch
      %20 = sbr.rel (%p18) target = $region8
    $region5: #{tpu_custom_call.1} parent=1 // loop_body
      %s22 = ssub.s32 %s17, 1
      %s23 = ssub.s32 %s17, 2
      %s24 = sadd.s32 %s17, 1
      %s25 = ssub.s32 %s17, %s24
      %p26 = scmp.eq.s32.totalorder %s25, 0
      %s28 = sadd.s32 %s27, 1
      %s29 = scalar_select %p26, %s27, %s28
      %p32 = pneg %p26
      %p33 = scmp.eq.s32.totalorder %s17, 1
      %p34 = por %p32, %p33
      %p35 = scmp.ne.s32.totalorder %s27, %s30
      %p36 = scmp.eq.s32.totalorder %s17, 0
      %p37 = por %p35, %p36
      %p38 = scmp.ne.s32.totalorder %s27, %s30
      %p39 = scmp.eq.s32.totalorder %s22, 1
      %p40 = por %p38, %p39
      %p41 = scmp.ne.s32.totalorder %s30, %s31
      %p42 = scmp.eq.s32.totalorder %s22, 0
      %p43 = por %p41, %p42
      %p44 = scmp.ne.s32.totalorder %s30, %s31
      %p45 = scmp.eq.s32.totalorder %s23, 1
      %p46 = por %p44, %p45
      %p48 = scmp.ne.s32.totalorder %s31, %s47
      %p49 = scmp.eq.s32.totalorder %s23, 0
      %p50 = por %p48, %p49
      %s52 = sadd.s32 %s51, 1
      %p55 = scmp.eq.s32.totalorder %s17, 1
      %p56 = scmp.ne.s32.totalorder %s51, %s53
      %p57 = scmp.eq.s32.totalorder %s17, 0
      %p58 = por %p56, %p57
      %p59 = scmp.ne.s32.totalorder %s51, %s53
      %p60 = scmp.eq.s32.totalorder %s22, 1
      %p61 = por %p59, %p60
      %p62 = scmp.ne.s32.totalorder %s53, %s54
      %p63 = scmp.eq.s32.totalorder %s22, 0
      %p64 = por %p62, %p63
      %p65 = scmp.ne.s32.totalorder %s53, %s54
      %p66 = scmp.eq.s32.totalorder %s23, 1
      %p67 = por %p65, %p66
      %p69 = scmp.ne.s32.totalorder %s54, %s68
      %p70 = scmp.eq.s32.totalorder %s23, 0
      %p71 = por %p69, %p70
      %s73 = sadd.s32 %s72, 1
      %p76 = scmp.eq.s32.totalorder %s17, 1
      %p77 = scmp.ne.s32.totalorder %s72, %s74
      %p78 = scmp.eq.s32.totalorder %s17, 0
      %p79 = por %p77, %p78
      %p80 = scmp.ne.s32.totalorder %s72, %s74
      %p81 = scmp.eq.s32.totalorder %s22, 1
      %p82 = por %p80, %p81
      %p83 = scmp.ne.s32.totalorder %s74, %s75
      %p84 = scmp.eq.s32.totalorder %s22, 0
      %p85 = por %p83, %p84
      %p86 = scmp.ne.s32.totalorder %s74, %s75
      %p87 = scmp.eq.s32.totalorder %s23, 1
      %p88 = por %p86, %p87
      %p90 = scmp.ne.s32.totalorder %s75, %s89
      %p91 = scmp.eq.s32.totalorder %s23, 0
      %p92 = por %p90, %p91
      %s94 = sadd.s32 %s93, 1
      %p97 = scmp.eq.s32.totalorder %s17, 1
      %p98 = scmp.ne.s32.totalorder %s93, %s95
      %p99 = scmp.eq.s32.totalorder %s17, 0
      %p100 = por %p98, %p99
      %p101 = scmp.ne.s32.totalorder %s93, %s95
      %p102 = scmp.eq.s32.totalorder %s22, 1
      %p103 = por %p101, %p102
      %p104 = scmp.ne.s32.totalorder %s95, %s96
      %p105 = scmp.eq.s32.totalorder %s22, 0
      %p106 = por %p104, %p105
      %p107 = scmp.ne.s32.totalorder %s95, %s96
      %p108 = scmp.eq.s32.totalorder %s23, 1
      %p109 = por %p107, %p108
      %p111 = scmp.ne.s32.totalorder %s96, %s110
      %p112 = scmp.eq.s32.totalorder %s23, 0
      %p113 = por %p111, %p112
      %s114 = ssub.s32 %s17, %s24
      %p115 = scmp.eq.s32.totalorder %s114, 0
      %s117 = sadd.s32 %s116, 1
      %s118 = scalar_select %p115, %s116, %s117
      %p121 = pneg %p115
      %p122 = scmp.eq.s32.totalorder %s17, 1
      %p123 = por %p121, %p122
      %p124 = scmp.ne.s32.totalorder %s116, %s119
      %p125 = scmp.eq.s32.totalorder %s17, 0
      %p126 = por %p124, %p125
      %p127 = scmp.ne.s32.totalorder %s116, %s119
      %p128 = scmp.eq.s32.totalorder %s22, 1
      %p129 = por %p127, %p128
      %p130 = scmp.ne.s32.totalorder %s119, %s120
      %p131 = scmp.eq.s32.totalorder %s22, 0
      %p132 = por %p130, %p131
      %p133 = scmp.ne.s32.totalorder %s119, %s120
      %p134 = scmp.eq.s32.totalorder %s23, 1
      %p135 = por %p133, %p134
      %p137 = scmp.ne.s32.totalorder %s120, %s136
      %p138 = scmp.eq.s32.totalorder %s23, 0
      %p139 = por %p137, %p138
      %p140 = scmp.le.s32.totalorder 1, %s17
      %p141 = scmp.lt.s32.totalorder %s17, 3
      %p142 = pnand %p140, %p141
      %p143 = pneg %p142
      // Predicated region
      $region9: #{tpu_custom_call.1} parent=5 // pred_check
        _
      $region10: #{tpu_custom_call.1} parent=5 // pred_check_branch
        %145 = sbr.rel (%p142) target = $region12
      $region11: #{tpu_custom_call.1} parent=5 // pred_region
        %s146 = ssub.s32 %s17, 1
        // Predicated region
        $region13: #{tpu_custom_call.1} parent=11 // pred_check
          %p147 = pneg %p64
        $region14: #{tpu_custom_call.1} parent=11 // pred_check_branch
          %149 = sbr.rel (%p147) target = $region16
        $region15: #{tpu_custom_call.1} parent=11 // pred_region
          %s151 = ssub.s32 512, 512
          %152 = vsyncadd [#allocation7], %s151
          %s153 = sshll.u32 [#allocation6], 4
          %s154 = int_to_ptr.vmem [resolvable:$true] %s153
          %159 = dma.hbm_to_vmem [thread:$0]  %s1, 512, %s154, [#allocation7], 256, 256, 16
        $region16: #{tpu_custom_call.1} parent=11 // pred_fallthru
          _
        // Predicated region
        $region17: #{tpu_custom_call.1} parent=11 // pred_check
          %p160 = pneg %p85
        $region18: #{tpu_custom_call.1} parent=11 // pred_check_branch
          %162 = sbr.rel (%p160) target = $region20
        $region19: #{tpu_custom_call.1} parent=11 // pred_region
          _
        $region20: #{tpu_custom_call.1} parent=11 // pred_fallthru
          _
        // Predicated region
        $region21: #{tpu_custom_call.1} parent=11 // pred_check
          %p163 = pneg %p106
        $region22: #{tpu_custom_call.1} parent=11 // pred_check_branch
          %165 = sbr.rel (%p163) target = $region24
        $region23: #{tpu_custom_call.1} parent=11 // pred_region
          %s167 = ssub.s32 512, 512
          %168 = vsyncadd [#allocation7], %s167
          %s169 = sshll.u32 [#allocation8], 4
          %s170 = int_to_ptr.vmem [resolvable:$true] %s169
          %175 = dma.hbm_to_vmem [thread:$0]  %s3, 512, %s170, [#allocation7], 256, 256, 16
        $region24: #{tpu_custom_call.1} parent=11 // pred_fallthru
          _
      $region12: #{tpu_custom_call.1} parent=5 // pred_fallthru
        _
      %p176 = scmp.lt.s32.totalorder %s17, 2
      // Predicated region
      $region25: #{tpu_custom_call.1} parent=5 // pred_check
        %p177 = pneg %p176
      $region26: #{tpu_custom_call.1} parent=5 // pred_check_branch
        %179 = sbr.rel (%p177) target = $region28
      $region27: #{tpu_custom_call.1} parent=5 // pred_region
        // Predicated region
        $region29: #{tpu_custom_call.1} parent=27 // pred_check
          %p180 = pneg %p37
        $region30: #{tpu_custom_call.1} parent=27 // pred_check_branch
          %182 = sbr.rel (%p180) target = $region32
        $region31: #{tpu_custom_call.1} parent=27 // pred_region
          %s183 = sand.u32 %s27, 1
          %s184 = scalar_lea.sflag [#allocation4], %s183
          %s185 = sand.u32 %s27, 1
          %s186 = smul.addr %s185, 32
          %s187 = scalar_lea.vmem [#allocation3], %s186
          %s189 = ssub.s32 512, 512
          %190 = vsyncadd %s184, %s189
          %s191 = smul.addr %s17, 4
          %s192 = smul.addr %s191, 128
          %s193 = scalar_lea.hbm %s0, %s192
          %s194 = sshll.u32 %s187, 4
          %s195 = int_to_ptr.vmem [resolvable:$true] %s194
          %200 = dma.hbm_to_vmem [thread:$0]  %s193, 512, %s195, %s184, 256, 256, 16
        $region32: #{tpu_custom_call.1} parent=27 // pred_fallthru
          _
      $region28: #{tpu_custom_call.1} parent=5 // pred_fallthru
        _
      %p201 = scmp.le.s32.totalorder 1, %s17
      %p202 = scmp.lt.s32.totalorder %s17, 3
      %p203 = pnand %p201, %p202
      %p204 = pneg %p203
      // Predicated region
      $region33: #{tpu_custom_call.1} parent=5 // pred_check
        _
      $region34: #{tpu_custom_call.1} parent=5 // pred_check_branch
        %206 = sbr.rel (%p203) target = $region36
      $region35: #{tpu_custom_call.1} parent=5 // pred_region
        %s207 = ssub.s32 %s17, 1
        %s208 = sand.u32 %s30, 1
        %s209 = scalar_lea.sflag [#allocation4], %s208
        %s210 = sand.u32 %s30, 1
        %s211 = smul.addr %s210, 32
        %s212 = scalar_lea.vmem [#allocation3], %s211
        // Predicated region
        $region37: #{tpu_custom_call.1} parent=35 // pred_check
          %p213 = pneg %p43
        $region38: #{tpu_custom_call.1} parent=35 // pred_check_branch
          %215 = sbr.rel (%p213) target = $region40
        $region39: #{tpu_custom_call.1} parent=35 // pred_region
          %216 = dma.done %s209, 512
        $region40: #{tpu_custom_call.1} parent=35 // pred_fallthru
          _
        // Predicated region
        $region41: #{tpu_custom_call.1} parent=35 // pred_check
          %p217 = pneg %p64
        $region42: #{tpu_custom_call.1} parent=35 // pred_check_branch
          %219 = sbr.rel (%p217) target = $region44
        $region43: #{tpu_custom_call.1} parent=35 // pred_region
          %220 = dma.done [#allocation7], 512
        $region44: #{tpu_custom_call.1} parent=35 // pred_fallthru
          _
        // Predicated region
        $region45: #{tpu_custom_call.1} parent=35 // pred_check
          %p221 = pneg %p106
        $region46: #{tpu_custom_call.1} parent=35 // pred_check_branch
          %223 = sbr.rel (%p221) target = $region48
        $region47: #{tpu_custom_call.1} parent=35 // pred_region
          %224 = dma.done [#allocation7], 512
        $region48: #{tpu_custom_call.1} parent=35 // pred_fallthru
          _
        %s225 = sand.u32 %s30, 1
        %s226 = scalar_lea.sflag [#allocation4], %s225
        %s227 = sand.u32 %s30, 1
        %s228 = smul.addr %s227, 32
        %s229 = scalar_lea.vmem [#allocation3], %s228
        %p230 = pneg %p43
        %p231 = pneg %p40
        %p232 = pneg %p64
        %p233 = pneg %p61
        %p234 = pneg %p85
        %p235 = pneg %p82
        %p236 = pneg %p106
        %p237 = pneg %p103
        %p238 = pneg %p132
        %p239 = pneg %p129
        %s240 = sand.u32 %s119, 1
        %s241 = scalar_lea.sflag [#allocation5], %s240
        %s242 = sand.u32 %s119, 1
        %s243 = smul.addr %s242, 32
        %s244 = scalar_lea.vmem [#allocation9], %s243
        %v245 = vld [vmem:[%s212] sm:$0xff]
        %v246 = vld [vmem:[%s212 + $0x8] sm:$0xff]
        %v247 = vld [vmem:[%s212 + $0x10] sm:$0xff]
        %v248 = vld [vmem:[%s212 + $0x18] sm:$0xff]
        %249 = vrot.lane.b32.xlu0 %v245, 17
        %v250 = vpop.permute.xlu0 %249
        %251 = vrot.lane.b32.xlu0 %v247, 17
        %v252 = vpop.permute.xlu0 %251
        %253 = vrot.lane.b32.xlu0 %v246, 17
        %v254 = vpop.permute.xlu0 %253
        %255 = vrot.lane.b32.xlu0 %v248, 17
        %v256 = vpop.permute.xlu0 %255
        %v257 = vlaneseq
        %v258 = vand.u32 %v257, 127
        %vm259 = vcmp.lt.s32.totalorder %v258, 17
        %v260 = vsel %vm259, %v250, %v254
        %v261 = vsel %vm259, %v252, %v256
        %v262 = vsel %vm259, %v254, %v250
        %v263 = vsel %vm259, %v256, %v252
        %v264 = vld [vmem:[#allocation8] ss:$8 sm:$0x3]
        %v266 = vlaneseq
        %v267 = vshrl.u32 %v266, 7
        %v268 = vsub.s32 0, %v267
        %v269 = vrot.slane %v264, %v268
        %v270 = vlaneseq
        %v271 = vshrl.u32 %v270, 7
        %v272 = vsub.s32 1, %v271
        %v273 = vrot.slane %v264, %v272
        %v276 = vmul.f32 %v262, %v269
        %v277 = vmul.f32 %v260, %v273
        %v278 = vmul.f32 %v263, %v269
        %v279 = vmul.f32 %v261, %v273
        %280 = vst [vmem:[#allocation2] sm:$0xff] %v276
        %281 = vst [vmem:[#allocation2 + $0x8] sm:$0xff] %v277
        %282 = vst [vmem:[#allocation2 + $0x10] sm:$0xff] %v278
        %283 = vst [vmem:[#allocation2 + $0x18] sm:$0xff] %v279
        %284 = vrot.lane.b32.xlu0 %v245, 16
        %v285 = vpop.permute.xlu0 %284
        %286 = vrot.lane.b32.xlu0 %v247, 16
        %v287 = vpop.permute.xlu0 %286
        %288 = vrot.lane.b32.xlu0 %v246, 16
        %v289 = vpop.permute.xlu0 %288
        %290 = vrot.lane.b32.xlu0 %v248, 16
        %v291 = vpop.permute.xlu0 %290
        %vm292 = vcmp.lt.s32.totalorder %v258, 16
        %v293 = vsel %vm292, %v285, %v289
        %v294 = vsel %vm292, %v287, %v291
        %v295 = vsel %vm292, %v289, %v285
        %v296 = vsel %vm292, %v291, %v287
        %s297 = scalar_lea.vmem [#allocation8], 1
        %v298 = vld [vmem:[%s297] ss:$8 sm:$0x3]
        %v300 = vlaneseq
        %v301 = vshrl.u32 %v300, 7
        %v302 = vsub.s32 0, %v301
        %v303 = vrot.slane %v298, %v302
        %v304 = vlaneseq
        %v305 = vshrl.u32 %v304, 7
        %v306 = vsub.s32 1, %v305
        %v307 = vrot.slane %v298, %v306
        %v310 = vmul.f32 %v295, %v303
        %v311 = vmul.f32 %v293, %v307
        %v312 = vmul.f32 %v296, %v303
        %v313 = vmul.f32 %v294, %v307
        %314 = vst [vmem:[#allocation2 + $0x20] sm:$0xff] %v310
        %315 = vst [vmem:[#allocation2 + $0x28] sm:$0xff] %v311
        %316 = vst [vmem:[#allocation2 + $0x30] sm:$0xff] %v312
        %317 = vst [vmem:[#allocation2 + $0x38] sm:$0xff] %v313
        %318 = vrot.lane.b32.xlu0 %v245, 15
        %v319 = vpop.permute.xlu0 %318
        %320 = vrot.lane.b32.xlu0 %v247, 15
        %v321 = vpop.permute.xlu0 %320
        %322 = vrot.lane.b32.xlu0 %v246, 15
        %v323 = vpop.permute.xlu0 %322
        %324 = vrot.lane.b32.xlu0 %v248, 15
        %v325 = vpop.permute.xlu0 %324
        %vm326 = vcmp.lt.s32.totalorder %v258, 15
        %v327 = vsel %vm326, %v319, %v323
        %v328 = vsel %vm326, %v321, %v325
        %v329 = vsel %vm326, %v323, %v319
        %v330 = vsel %vm326, %v325, %v321
        %s331 = scalar_lea.vmem [#allocation8], 2
        %v332 = vld [vmem:[%s331] ss:$8 sm:$0x3]
        %v334 = vlaneseq
        %v335 = vshrl.u32 %v334, 7
        %v336 = vsub.s32 0, %v335
        %v337 = vrot.slane %v332, %v336
        %v338 = vlaneseq
        %v339 = vshrl.u32 %v338, 7
        %v340 = vsub.s32 1, %v339
        %v341 = vrot.slane %v332, %v340
        %v344 = vmul.f32 %v329, %v337
        %v345 = vmul.f32 %v327, %v341
        %v346 = vmul.f32 %v330, %v337
        %v347 = vmul.f32 %v328, %v341
        %348 = vst [vmem:[#allocation2 + $0x40] sm:$0xff] %v344
        %349 = vst [vmem:[#allocation2 + $0x48] sm:$0xff] %v345
        %350 = vst [vmem:[#allocation2 + $0x50] sm:$0xff] %v346
        %351 = vst [vmem:[#allocation2 + $0x58] sm:$0xff] %v347
        %352 = vrot.lane.b32.xlu0 %v245, 1
        %v353 = vpop.permute.xlu0 %352
        %354 = vrot.lane.b32.xlu0 %v247, 1
        %v355 = vpop.permute.xlu0 %354
        %356 = vrot.lane.b32.xlu0 %v246, 1
        %v357 = vpop.permute.xlu0 %356
        %358 = vrot.lane.b32.xlu0 %v248, 1
        %v359 = vpop.permute.xlu0 %358
        %vm360 = vcmp.lt.s32.totalorder %v258, 1
        %v361 = vsel %vm360, %v353, %v357
        %v362 = vsel %vm360, %v355, %v359
        %v363 = vsel %vm360, %v357, %v353
        %v364 = vsel %vm360, %v359, %v355
        %s365 = scalar_lea.vmem [#allocation8], 3
        %v366 = vld [vmem:[%s365] ss:$8 sm:$0x3]
        %v368 = vlaneseq
        %v369 = vshrl.u32 %v368, 7
        %v370 = vsub.s32 0, %v369
        %v371 = vrot.slane %v366, %v370
        %v372 = vlaneseq
        %v373 = vshrl.u32 %v372, 7
        %v374 = vsub.s32 1, %v373
        %v375 = vrot.slane %v366, %v374
        %v378 = vmul.f32 %v363, %v371
        %v379 = vmul.f32 %v361, %v375
        %v380 = vmul.f32 %v364, %v371
        %v381 = vmul.f32 %v362, %v375
        %382 = vst [vmem:[#allocation2 + $0x60] sm:$0xff] %v378
        %383 = vst [vmem:[#allocation2 + $0x68] sm:$0xff] %v379
        %384 = vst [vmem:[#allocation2 + $0x70] sm:$0xff] %v380
        %385 = vst [vmem:[#allocation2 + $0x78] sm:$0xff] %v381
        %386 = vst [vmem:[#allocation2 + $0x80] sm:$0xff] %v245
        %387 = vst [vmem:[#allocation2 + $0x88] sm:$0xff] %v246
        %388 = vst [vmem:[#allocation2 + $0x90] sm:$0xff] %v247
        %389 = vst [vmem:[#allocation2 + $0x98] sm:$0xff] %v248
        %390 = vrot.lane.b32.xlu0 %v245, 127
        %v391 = vpop.permute.xlu0 %390
        %392 = vrot.lane.b32.xlu0 %v247, 127
        %v393 = vpop.permute.xlu0 %392
        %394 = vrot.lane.b32.xlu0 %v246, 127
        %v395 = vpop.permute.xlu0 %394
        %396 = vrot.lane.b32.xlu0 %v248, 127
        %v397 = vpop.permute.xlu0 %396
        %vm398 = vcmp.lt.s32.totalorder %v258, 127
        %v399 = vsel %vm398, %v391, %v395
        %v400 = vsel %vm398, %v393, %v397
        %v401 = vsel %vm398, %v395, %v391
        %v402 = vsel %vm398, %v397, %v393
        %s403 = scalar_lea.vmem [#allocation8], 5
        %v404 = vld [vmem:[%s403] ss:$8 sm:$0x3]
        %v406 = vlaneseq
        %v407 = vshrl.u32 %v406, 7
        %v408 = vsub.s32 0, %v407
        %v409 = vrot.slane %v404, %v408
        %v410 = vlaneseq
        %v411 = vshrl.u32 %v410, 7
        %v412 = vsub.s32 1, %v411
        %v413 = vrot.slane %v404, %v412
        %v416 = vmul.f32 %v399, %v409
        %v417 = vmul.f32 %v401, %v413
        %v418 = vmul.f32 %v400, %v409
        %v419 = vmul.f32 %v402, %v413
        %420 = vst [vmem:[#allocation2 + $0xa0] sm:$0xff] %v416
        %421 = vst [vmem:[#allocation2 + $0xa8] sm:$0xff] %v417
        %422 = vst [vmem:[#allocation2 + $0xb0] sm:$0xff] %v418
        %423 = vst [vmem:[#allocation2 + $0xb8] sm:$0xff] %v419
        %424 = vrot.lane.b32.xlu0 %v245, 113
        %v425 = vpop.permute.xlu0 %424
        %426 = vrot.lane.b32.xlu0 %v247, 113
        %v427 = vpop.permute.xlu0 %426
        %428 = vrot.lane.b32.xlu0 %v246, 113
        %v429 = vpop.permute.xlu0 %428
        %430 = vrot.lane.b32.xlu0 %v248, 113
        %v431 = vpop.permute.xlu0 %430
        %vm432 = vcmp.lt.s32.totalorder %v258, 113
        %v433 = vsel %vm432, %v425, %v429
        %v434 = vsel %vm432, %v427, %v431
        %v435 = vsel %vm432, %v429, %v425
        %v436 = vsel %vm432, %v431, %v427
        %s437 = scalar_lea.vmem [#allocation8], 6
        %v438 = vld [vmem:[%s437] ss:$8 sm:$0x3]
        %v440 = vlaneseq
        %v441 = vshrl.u32 %v440, 7
        %v442 = vsub.s32 0, %v441
        %v443 = vrot.slane %v438, %v442
        %v444 = vlaneseq
        %v445 = vshrl.u32 %v444, 7
        %v446 = vsub.s32 1, %v445
        %v447 = vrot.slane %v438, %v446
        %v450 = vmul.f32 %v433, %v443
        %v451 = vmul.f32 %v435, %v447
        %v452 = vmul.f32 %v434, %v443
        %v453 = vmul.f32 %v436, %v447
        %454 = vst [vmem:[#allocation2 + $0xc0] sm:$0xff] %v450
        %455 = vst [vmem:[#allocation2 + $0xc8] sm:$0xff] %v451
        %456 = vst [vmem:[#allocation2 + $0xd0] sm:$0xff] %v452
        %457 = vst [vmem:[#allocation2 + $0xd8] sm:$0xff] %v453
        %458 = vrot.lane.b32.xlu0 %v245, 112
        %v459 = vpop.permute.xlu0 %458
        %460 = vrot.lane.b32.xlu0 %v247, 112
        %v461 = vpop.permute.xlu0 %460
        %462 = vrot.lane.b32.xlu0 %v246, 112
        %v463 = vpop.permute.xlu0 %462
        %464 = vrot.lane.b32.xlu0 %v248, 112
        %v465 = vpop.permute.xlu0 %464
        %vm466 = vcmp.lt.s32.totalorder %v258, 112
        %v467 = vsel %vm466, %v459, %v463
        %v468 = vsel %vm466, %v461, %v465
        %v469 = vsel %vm466, %v463, %v459
        %v470 = vsel %vm466, %v465, %v461
        %s471 = scalar_lea.vmem [#allocation8], 7
        %v472 = vld [vmem:[%s471] ss:$8 sm:$0x3]
        %v474 = vlaneseq
        %v475 = vshrl.u32 %v474, 7
        %v476 = vsub.s32 0, %v475
        %v477 = vrot.slane %v472, %v476
        %v478 = vlaneseq
        %v479 = vshrl.u32 %v478, 7
        %v480 = vsub.s32 1, %v479
        %v481 = vrot.slane %v472, %v480
        %v484 = vmul.f32 %v467, %v477
        %v485 = vmul.f32 %v469, %v481
        %v486 = vmul.f32 %v468, %v477
        %v487 = vmul.f32 %v470, %v481
        %488 = vst [vmem:[#allocation2 + $0xe0] sm:$0xff] %v484
        %489 = vst [vmem:[#allocation2 + $0xe8] sm:$0xff] %v485
        %490 = vst [vmem:[#allocation2 + $0xf0] sm:$0xff] %v486
        %491 = vst [vmem:[#allocation2 + $0xf8] sm:$0xff] %v487
        %492 = vrot.lane.b32.xlu0 %v245, 111
        %v493 = vpop.permute.xlu0 %492
        %494 = vrot.lane.b32.xlu0 %v247, 111
        %v495 = vpop.permute.xlu0 %494
        %496 = vrot.lane.b32.xlu0 %v246, 111
        %v497 = vpop.permute.xlu0 %496
        %498 = vrot.lane.b32.xlu0 %v248, 111
        %v499 = vpop.permute.xlu0 %498
        %vm500 = vcmp.lt.s32.totalorder %v258, 111
        %v501 = vsel %vm500, %v493, %v497
        %v502 = vsel %vm500, %v495, %v499
        %v503 = vsel %vm500, %v497, %v493
        %v504 = vsel %vm500, %v499, %v495
        %s505 = scalar_lea.vmem [#allocation8], 16
        %v506 = vld [vmem:[%s505] ss:$8 sm:$0x3]
        %v508 = vlaneseq
        %v509 = vshrl.u32 %v508, 7
        %v510 = vsub.s32 0, %v509
        %v511 = vrot.slane %v506, %v510
        %v512 = vlaneseq
        %v513 = vshrl.u32 %v512, 7
        %v514 = vsub.s32 1, %v513
        %v515 = vrot.slane %v506, %v514
        %v518 = vmul.f32 %v501, %v511
        %v519 = vmul.f32 %v503, %v515
        %v520 = vmul.f32 %v502, %v511
        %v521 = vmul.f32 %v504, %v515
        %522 = vst [vmem:[#allocation2 + $0x100] sm:$0xff] %v518
        %523 = vst [vmem:[#allocation2 + $0x108] sm:$0xff] %v519
        %524 = vst [vmem:[#allocation2 + $0x110] sm:$0xff] %v520
        %525 = vst [vmem:[#allocation2 + $0x118] sm:$0xff] %v521
        %v526 = vld [vmem:[#allocation6] sm:$0xff]
        %v527 = vld [vmem:[#allocation6 + $0x8] sm:$0xff]
        %v528 = vld [vmem:[#allocation6 + $0x10] sm:$0xff]
        %v529 = vld [vmem:[#allocation6 + $0x18] sm:$0xff]
        %v530 = vld [vmem:[#allocation2] sm:$0xff]
        %v531 = vld [vmem:[#allocation2 + $0x8] sm:$0xff]
        %v532 = vld [vmem:[#allocation2 + $0x10] sm:$0xff]
        %v533 = vld [vmem:[#allocation2 + $0x18] sm:$0xff]
        %v534 = vld [vmem:[#allocation2 + $0x20] sm:$0xff]
        %v535 = vld [vmem:[#allocation2 + $0x28] sm:$0xff]
        %v536 = vld [vmem:[#allocation2 + $0x30] sm:$0xff]
        %v537 = vld [vmem:[#allocation2 + $0x38] sm:$0xff]
        %v538 = vld [vmem:[#allocation2 + $0x40] sm:$0xff]
        %v539 = vld [vmem:[#allocation2 + $0x48] sm:$0xff]
        %v540 = vld [vmem:[#allocation2 + $0x50] sm:$0xff]
        %v541 = vld [vmem:[#allocation2 + $0x58] sm:$0xff]
        %v542 = vld [vmem:[#allocation2 + $0x60] sm:$0xff]
        %v543 = vld [vmem:[#allocation2 + $0x68] sm:$0xff]
        %v544 = vld [vmem:[#allocation2 + $0x70] sm:$0xff]
        %v545 = vld [vmem:[#allocation2 + $0x78] sm:$0xff]
        %v546 = vld [vmem:[#allocation2 + $0x80] sm:$0xff]
        %v547 = vld [vmem:[#allocation2 + $0x88] sm:$0xff]
        %v548 = vld [vmem:[#allocation2 + $0x90] sm:$0xff]
        %v549 = vld [vmem:[#allocation2 + $0x98] sm:$0xff]
        %v550 = vld [vmem:[#allocation2 + $0xa0] sm:$0xff]
        %v551 = vld [vmem:[#allocation2 + $0xa8] sm:$0xff]
        %v552 = vld [vmem:[#allocation2 + $0xb0] sm:$0xff]
        %v553 = vld [vmem:[#allocation2 + $0xb8] sm:$0xff]
        %v554 = vld [vmem:[#allocation2 + $0xc0] sm:$0xff]
        %v555 = vld [vmem:[#allocation2 + $0xc8] sm:$0xff]
        %v556 = vld [vmem:[#allocation2 + $0xd0] sm:$0xff]
        %v557 = vld [vmem:[#allocation2 + $0xd8] sm:$0xff]
        %v558 = vld [vmem:[#allocation2 + $0xe0] sm:$0xff]
        %v559 = vld [vmem:[#allocation2 + $0xe8] sm:$0xff]
        %v560 = vld [vmem:[#allocation2 + $0xf0] sm:$0xff]
        %v561 = vld [vmem:[#allocation2 + $0xf8] sm:$0xff]
        %v562 = vld [vmem:[#allocation2 + $0x100] sm:$0xff]
        %v563 = vld [vmem:[#allocation2 + $0x108] sm:$0xff]
        %v564 = vld [vmem:[#allocation2 + $0x110] sm:$0xff]
        %v565 = vld [vmem:[#allocation2 + $0x118] sm:$0xff]
        %v566 = vld [vmem:[%s2] sm:$0xff]
        %v567 = vld [vmem:[%s2 + $0x8] sm:$0xff]
        %569 = vset.pattern.permute.xlu0 0
        %570 = vperm.xlu0 %569, %v566
        %v571 = vpop.permute.xlu0 %570
        %574 = vset.pattern.permute.xlu0 0
        %575 = vperm.xlu0 %574, %v567
        %v576 = vpop.permute.xlu0 %575
        %vm578 = vcmask 130048
        %v580 = vsel %vm578, %v527, 0
        %v583 = vsel %vm578, %v529, 0
        %585 = vmatprep.subr.mxu0 %v531
        %586 = vmatpush1.msra.mxu0 %v530
        %587 = vmatprep.subr.mxu0 %v533
        %588 = vmatpush1.msra.mxu0 %v532
        %589 = vmatprep.subr.mxu0 %v535
        %590 = vmatpush1.msra.mxu0 %v534
        %591 = vmatprep.subr.mxu0 %v537
        %592 = vmatpush1.msra.mxu0 %v536
        %593 = vmatprep.subr.mxu0 %v539
        %594 = vmatpush1.msra.mxu0 %v538
        %595 = vmatprep.subr.mxu0 %v541
        %596 = vmatpush1.msra.mxu0 %v540
        %597 = vmatprep.subr.mxu0 %v543
        %598 = vmatpush1.msra.mxu0 %v542
        %599 = vmatprep.subr.mxu0 %v545
        %600 = vmatpush1.msra.mxu0 %v544
        %601 = vmatprep.subr.mxu0 %v547
        %602 = vmatpush1.msra.mxu0 %v546
        %603 = vmatprep.subr.mxu0 %v549
        %604 = vmatpush1.msra.mxu0 %v548
        %605 = vmatprep.subr.mxu0 %v551
        %606 = vmatpush1.msra.mxu0 %v550
        %607 = vmatprep.subr.mxu0 %v553
        %608 = vmatpush1.msra.mxu0 %v552
        %609 = vmatprep.subr.mxu0 %v555
        %610 = vmatpush1.msra.mxu0 %v554
        %611 = vmatprep.subr.mxu0 %v557
        %612 = vmatpush1.msra.mxu0 %v556
        %613 = vmatprep.subr.mxu0 %v559
        %614 = vmatpush1.msra.mxu0 %v558
        %615 = vmatprep.subr.mxu0 %v561
        %616 = vmatpush1.msra.mxu0 %v560
        %617 = vmatprep.subr.mxu0 %v563
        %618 = vmatpush1.msra.mxu0 %v562
        %619 = vmatprep.subr.mxu0 %v565
        %620 = vmatpush1.msra.mxu0 %v564
        %621 = vmatprep.subr.mxu0 0.0
        %622 = vmatpush1.msra.mxu0 0.0
        %623 = vmatprep.subr.mxu0 0.0
        %624 = vmatpush1.msra.mxu0 0.0
        %625 = vmatprep.subr.mxu0 0.0
        %626 = vmatpush1.msra.mxu0 0.0
        %627 = vmatprep.subr.mxu0 0.0
        %628 = vmatpush1.msra.mxu0 0.0
        %629 = vmatprep.subr.mxu0 0.0
        %630 = vmatpush1.msra.mxu0 0.0
        %631 = vmatprep.subr.mxu0 0.0
        %632 = vmatpush1.msra.mxu0 0.0
        %633 = vmatprep.subr.mxu0 0.0
        %634 = vmatpush1.msra.mxu0 0.0
        %635 = vmatprep.subr.mxu0 0.0
        %636 = vmatpush1.msra.mxu0 0.0
        %637 = vmatprep.subr.mxu0 0.0
        %638 = vmatpush1.msra.mxu0 0.0
        %639 = vmatprep.subr.mxu0 0.0
        %640 = vmatpush1.msra.mxu0 0.0
        %641 = vmatprep.subr.mxu0 0.0
        %642 = vmatpush1.msra.mxu0 0.0
        %643 = vmatprep.subr.mxu0 0.0
        %644 = vmatpush1.msra.mxu0 0.0
        %645 = vmatprep.subr.mxu0 0.0
        %646 = vmatpush1.msra.mxu0 0.0
        %647 = vmatprep.subr.mxu0 0.0
        %648 = vmatpush1.msra.mxu0 0.0
        %649 = vmatprep.mubr.f32.mxu0 %v580
        %650 = vmatmul.mubr.f32.gmra.mrb[0].mxu0 %v526
        %v651 = vpop.f32.mrb[0].mxu0
        %v652 = vadd.f32 %v571, %v651
        %v653 = vpop.f32.mrb[0].mxu0
        %v654 = vadd.f32 %v571, %v653
        %655 = vmatprep.mubr.f32.mxu0 %v583
        %656 = vmatmul.mubr.f32.gmra.mrb[0].mxu0 %v528
        %v657 = vpop.f32.mrb[0].mxu0
        %v658 = vadd.f32 %v576, %v657
        %v659 = vpop.f32.mrb[0].mxu0
        %v660 = vadd.f32 %v576, %v659
        %661 = vdwg.mxu0
        %662 = vst [vmem:[%s244] sm:$0xff] %v652
        %663 = vst [vmem:[%s244 + $0x8] sm:$0xff] %v654
        %664 = vst [vmem:[%s244 + $0x10] sm:$0xff] %v658
        %665 = vst [vmem:[%s244 + $0x18] sm:$0xff] %v660
        %s666 = sand.u32 %s119, 1
        %s667 = scalar_lea.sflag [#allocation5], %s666
        %s668 = sand.u32 %s119, 1
        %s669 = smul.addr %s668, 32
        %s670 = scalar_lea.vmem [#allocation9], %s669
        // Predicated region
        $region49: #{tpu_custom_call.1} parent=35 // pred_check
          %p671 = pneg %p129
        $region50: #{tpu_custom_call.1} parent=35 // pred_check_branch
          %673 = sbr.rel (%p671) target = $region52
        $region51: #{tpu_custom_call.1} parent=35 // pred_region
          %s675 = ssub.s32 512, 512
          %676 = vsyncadd %s667, %s675
          %s677 = smul.addr %s22, 4
          %s678 = smul.addr %s677, 128
          %s679 = scalar_lea.hbm %s4, %s678
          %s680 = sshll.u32 %s670, 4
          %s681 = int_to_ptr.vmem [resolvable:$true] %s680
          %686 = dma.vmem_to_hbm [thread:$0]  %s681, 512, %s679, %s667, 256, 256, 16
        $region52: #{tpu_custom_call.1} parent=35 // pred_fallthru
          _
      $region36: #{tpu_custom_call.1} parent=5 // pred_fallthru
        _
      %p687 = scmp.le.s32.totalorder 2, %s17
      // Predicated region
      $region53: #{tpu_custom_call.1} parent=5 // pred_check
        %p688 = pneg %p687
      $region54: #{tpu_custom_call.1} parent=5 // pred_check_branch
        %690 = sbr.rel (%p688) target = $region56
      $region55: #{tpu_custom_call.1} parent=5 // pred_region
        %s691 = ssub.s32 %s17, 2
        // Predicated region
        $region57: #{tpu_custom_call.1} parent=55 // pred_check
          %p692 = pneg %p135
        $region58: #{tpu_custom_call.1} parent=55 // pred_check_branch
          %694 = sbr.rel (%p692) target = $region60
        $region59: #{tpu_custom_call.1} parent=55 // pred_region
          %s695 = sand.u32 %s120, 1
          %s696 = scalar_lea.sflag [#allocation5], %s695
          %s697 = sand.u32 %s120, 1
          %s698 = smul.addr %s697, 32
          %s699 = scalar_lea.vmem [#allocation9], %s698
          %700 = dma.done %s696, 512
        $region60: #{tpu_custom_call.1} parent=55 // pred_fallthru
          _
      $region56: #{tpu_custom_call.1} parent=5 // pred_fallthru
        _
    $region6: #{tpu_custom_call.1} parent=1 // loop_footer
      %s21 = sadd.s32 1, %s17
    $region7: #{tpu_custom_call.1} parent=1 // loop_footer_branch
      %16 = sbr.rel target = $region3
    $region8: #{tpu_custom_call.1} parent=1 // loop_exit
      _
    %701 = vsyncpa [#allocation4], 1
    %s702 = scalar_lea.sflag [#allocation4], 1
    %703 = vsyncpa %s702, 1
    %704 = vsyncpa [#allocation7], 1
    %705 = vsyncpa [#allocation5], 1
    %s706 = scalar_lea.sflag [#allocation5], 1
    %707 = vsyncpa %s706, 1

</llo_original>
